<compile_context>
chip_gen: v5e
topology: v5e:2x2
jax: 0.10.0
libtpu: 0.0.40
codegen_flags: <defaults>
</compile_context>

<pallas_src>
import functools

import jax
import jax.numpy as jnp
from jax.experimental import pallas as pl
from jax.experimental.pallas import tpu as pltpu


def _round_up(x, m):
    return (x + m - 1) // m * m


# ---------------------------------------------------------------------------
# Kernels
# ---------------------------------------------------------------------------
def _fused_kernel(scale_ref, x_ref, w_ref, b_ref, o_ref, *, normalize):
    """One row tile: (tm, K) . (E, K)^T, then scale + bias (+ l2norm)."""
    acc = jax.lax.dot_general(
        x_ref[...], w_ref[...],
        dimension_numbers=(((1,), (1,)), ((), ())),   # contract K with K (trans_b)
        preferred_element_type=jnp.float32,
    )
    feat = acc * scale_ref[0, 0] + b_ref[...].astype(jnp.float32)
    if normalize:
        ss = jnp.sum(feat * feat, axis=-1, keepdims=True)
        # epsilon placement matches SCAN's l2norm: sqrt(sum) + 1e-8
        feat = feat * pl.reciprocal(jnp.sqrt(ss) + 1e-8, approx=True)
    o_ref[...] = feat.astype(o_ref.dtype)


def _ktiled_kernel(scale_ref, x_ref, w_ref, b_ref, o_ref, acc_ref, *, normalize):
    """K-reduction fallback when the weight is too large to hold resident."""
    k = pl.program_id(1)

    @pl.when(k == 0)
    def _():
        acc_ref[...] = jnp.zeros_like(acc_ref)

    acc_ref[...] += jax.lax.dot_general(
        x_ref[...], w_ref[...],
        dimension_numbers=(((1,), (1,)), ((), ())),
        preferred_element_type=jnp.float32,
    )

    @pl.when(k == pl.num_programs(1) - 1)
    def _():
        feat = acc_ref[...] * scale_ref[0, 0] + b_ref[...].astype(jnp.float32)
        if normalize:
            ss = jnp.sum(feat * feat, axis=-1, keepdims=True)
            feat = feat * pl.reciprocal(jnp.sqrt(ss) + 1e-8, approx=True)
        o_ref[...] = feat.astype(o_ref.dtype)


# ---------------------------------------------------------------------------
# Wrapper
# ---------------------------------------------------------------------------
_VMEM_LIMIT = 64 * 1024 * 1024       # safe on v7x (64 MiB physical VMEM)
_VMEM_BUDGET = 44 * 1024 * 1024      # headroom for double-buffering / spills


def encoder_image_weight_norm_precomp(images, weight_v, weight_g, bias,
                                      *, no_imgnorm=False, force_k_tile=None):
    """images: (..., img_dim); weight_v: (embed, img_dim); weight_g: scalar; bias: (embed,)."""
    lead_shape = images.shape[:-1]
    img_dim = images.shape[-1]
    embed_size, kd = weight_v.shape
    assert kd == img_dim and bias.shape == (embed_size,)
    images2d = images.reshape(-1, img_dim)
    M = images2d.shape[0]
    out_dtype = images.dtype
    itemsize = jnp.dtype(out_dtype).itemsize

    # weight_norm(dim=None): scalar rescale g / ||V||_F. Applied in-kernel to
    # the matmul result; V goes to the kernel untouched (no scaled copy and no
    # HBM transpose pass).
    v_norm = jnp.sqrt(jnp.sum(weight_v.astype(jnp.float32) ** 2))
    scale = (weight_g.astype(jnp.float32).reshape(()) / v_norm).reshape(1, 1)

    # Pad the embed (output lane) dim to a multiple of 128 for lane-dense
    # stores. Padded weight rows / bias entries are zero -> padded feature
    # columns are exactly 0 and do not affect the row L2 norm.
    embed_pad = _round_up(embed_size, 128)
    w = weight_v.astype(out_dtype)
    b = bias.astype(jnp.float32).reshape(1, embed_size)
    if embed_pad != embed_size:
        w = jnp.pad(w, ((0, embed_pad - embed_size), (0, 0)))
        b = jnp.pad(b, ((0, 0), (0, embed_pad - embed_size)))

    # Row tile: large enough to amortize per-grid-step overhead and fill the
    # MXU, but keep >= 2 row blocks when M allows so the parallel axis can be
    # sharded across both v7x TensorCores.
    row_align = 8 if itemsize >= 4 else 16
    tm = min(256, _round_up(M, row_align))
    if M > row_align and _round_up(M, tm) == tm:
        tm = _round_up((tm + 1) // 2, row_align)
    m_pad = _round_up(M, tm)
    x = images2d if m_pad == M else jnp.pad(images2d, ((0, m_pad - M), (0, 0)))

    normalize = not no_imgnorm
    grid_m = m_pad // tm

    # VMEM footprint if the whole weight stays resident (single K block).
    resident_bytes = (
        2 * tm * img_dim * itemsize            # x tile (double-buffered)
        + 2 * embed_pad * img_dim * itemsize   # weight (counted x2, conservative)
        + 2 * embed_pad * 4                    # bias
        + 2 * tm * embed_pad * itemsize        # out tile (double-buffered)
        + tm * embed_pad * 4                   # f32 intermediates
    )
    use_single_k = (resident_bytes <= _VMEM_BUDGET) and (force_k_tile is None)

    if use_single_k:
        out = pl.pallas_call(
            functools.partial(_fused_kernel, normalize=normalize),
            out_shape=jax.ShapeDtypeStruct((m_pad, embed_pad), out_dtype),
            grid_spec=pltpu.PrefetchScalarGridSpec(
                num_scalar_prefetch=0,
                grid=(grid_m,),
                in_specs=[
                    pl.BlockSpec(memory_space=pltpu.MemorySpace.SMEM),      # scale (1,1)
                    pl.BlockSpec((tm, img_dim), lambda i: (i, 0)),          # x row tile
                    pl.BlockSpec((embed_pad, img_dim), lambda i: (0, 0)),   # weight, resident
                    pl.BlockSpec((1, embed_pad), lambda i: (0, 0)),         # bias, resident
                ],
                out_specs=pl.BlockSpec((tm, embed_pad), lambda i: (i, 0)),
            ),
            compiler_params=pltpu.CompilerParams(
                dimension_semantics=("parallel",),
                vmem_limit_bytes=_VMEM_LIMIT,
            ),
        )(scale, x, w, b)
    else:
        # Fallback: stream the weight in (embed_pad, tk) slabs with an f32
        # accumulator; scale/bias/l2norm fused into the last K step.
        tk = force_k_tile if force_k_tile is not None else 512
        tk = min(tk, _round_up(img_dim, 128))
        k_pad = _round_up(img_dim, tk)
        if k_pad != img_dim:
            x = jnp.pad(x, ((0, 0), (0, k_pad - img_dim)))
            w = jnp.pad(w, ((0, 0), (0, k_pad - img_dim)))
        out = pl.pallas_call(
            functools.partial(_ktiled_kernel, normalize=normalize),
            out_shape=jax.ShapeDtypeStruct((m_pad, embed_pad), out_dtype),
            grid_spec=pltpu.PrefetchScalarGridSpec(
                num_scalar_prefetch=0,
                grid=(grid_m, k_pad // tk),
                in_specs=[
                    pl.BlockSpec(memory_space=pltpu.MemorySpace.SMEM),      # scale
                    pl.BlockSpec((tm, tk), lambda i, k: (i, k)),            # x tile
                    pl.BlockSpec((embed_pad, tk), lambda i, k: (0, k)),     # weight slab
                    pl.BlockSpec((1, embed_pad), lambda i, k: (0, 0)),      # bias
                ],
                out_specs=pl.BlockSpec((tm, embed_pad), lambda i, k: (i, 0)),
                scratch_shapes=[pltpu.VMEM((tm, embed_pad), jnp.float32)],
            ),
            compiler_params=pltpu.CompilerParams(
                dimension_semantics=("parallel", "arbitrary"),
                vmem_limit_bytes=_VMEM_LIMIT,
            ),
        )(scale, x, w, b)

    out = out[:M, :embed_size]
    return out.reshape(*lead_shape, embed_size)


# ---------------------------------------------------------------------------
# Pure-JAX reference (mirrors the PyTorch module)
# ---------------------------------------------------------------------------
def _reference(images, weight_v, weight_g, bias, no_imgnorm=False):
    v_norm = jnp.sqrt(jnp.sum(weight_v.astype(jnp.float32) ** 2))
    w_eff = (weight_g.astype(jnp.float32) / v_norm) * weight_v.astype(jnp.float32)
    feat = images.astype(jnp.float32) @ w_eff.T + bias.astype(jnp.float32)
    if no_imgnorm:
        return feat
    norm = jnp.sqrt(jnp.sum(feat * feat, axis=-1, keepdims=True)) + 1e-8
    return feat / norm


if __name__ == "__main__":
    key = jax.random.PRNGKey(0)
    k1, k2, k3 = jax.random.split(key, 3)

    # Small shapes consistent with the module (precomputed region features).
    M, img_dim, embed_size = 16, 256, 128
    images = jax.random.normal(k1, (M, img_dim), dtype=jnp.float32)
    # nn.Linear(img_dim, embed_size): weight (embed, img_dim), bias (embed,)
    weight_v = jax.random.normal(k2, (embed_size, img_dim), dtype=jnp.float32) * 0.05
    bias = jax.random.normal(k3, (embed_size,), dtype=jnp.float32) * 0.01
    # weight_norm(dim=None) init: g = ||V||_F (scalar); perturb so scale != 1.
    weight_g = jnp.sqrt(jnp.sum(weight_v ** 2)) * jnp.float32(1.3)

    ref = _reference(images, weight_v, weight_g, bias)

    # 1) Main path: weight resident in VMEM, single fused grid axis.
    out = jax.block_until_ready(
        encoder_image_weight_norm_precomp(images, weight_v, weight_g, bias))
    assert out.shape == (M, embed_size)
    assert jnp.max(jnp.abs(out - ref)) < 2e-3, "single-K path mismatch"

    # 2) Forced K-tiled fallback path must match too.
    out_kt = jax.block_until_ready(
        encoder_image_weight_norm_precomp(images, weight_v, weight_g, bias,
                                          force_k_tile=128))
    assert jnp.max(jnp.abs(out_kt - ref)) < 2e-3, "K-tiled path mismatch"

    # 3) Ragged shapes exercise the zero-padding (embed not a multiple of 128).
    M2, embed2 = 12, 96
    img2 = jax.random.normal(k1, (M2, img_dim), dtype=jnp.float32)
    wv2 = jax.random.normal(k2, (embed2, img_dim), dtype=jnp.float32) * 0.05
    b2 = jax.random.normal(k3, (embed2,), dtype=jnp.float32) * 0.01
    g2 = jnp.sqrt(jnp.sum(wv2 ** 2)) * jnp.float32(0.7)
    out2 = jax.block_until_ready(
        encoder_image_weight_norm_precomp(img2, wv2, g2, b2))
    ref2 = _reference(img2, wv2, g2, b2)
    assert out2.shape == (M2, embed2)
    assert jnp.max(jnp.abs(out2 - ref2)) < 2e-3, "ragged-shape mismatch"

    # 4) no_imgnorm=True path: linear + bias only (no l2norm).
    out3 = jax.block_until_ready(
        encoder_image_weight_norm_precomp(images, weight_v, weight_g, bias,
                                          no_imgnorm=True))
    ref3 = _reference(images, weight_v, weight_g, bias, no_imgnorm=True)
    assert jnp.max(jnp.abs(out3 - ref3)) < 2e-3, "no_imgnorm path mismatch"

    # 5) 3-D input (batch, regions, img_dim) — Linear applies over last dim.
    B, R = 2, 8
    img3 = jax.random.normal(k3, (B, R, img_dim), dtype=jnp.float32)
    out4 = jax.block_until_ready(
        encoder_image_weight_norm_precomp(img3, weight_v, weight_g, bias))
    ref4 = _reference(img3, weight_v, weight_g, bias)
    assert out4.shape == (B, R, embed_size)
    assert jnp.max(jnp.abs(out4 - ref4)) < 2e-3, "3-D input mismatch"

    print("KERNEL_OK")
</pallas_src>

<mosaic_0001>
module attributes {stable_mosaic.version = 11 : i64} {
  func.func @_fused_kernel(%arg0: i32, %arg1: memref<1x1xf32, #tpu.memory_space<smem>>, %arg2: memref<8x256xf32, #tpu.memory_space<vmem>>, %arg3: memref<128x256xf32, #tpu.memory_space<vmem>>, %arg4: memref<1x128xf32, #tpu.memory_space<vmem>>, %arg5: memref<8x128xf32, #tpu.memory_space<vmem>>) attributes {dimension_semantics = [#tpu.dimension_semantics<parallel>], iteration_bounds = array<i64: 2>, scalar_prefetch = 0 : i64, scratch_operands = 0 : i64, tpu.core_type = #tpu.core_type<tc>, window_params = [{transform_indices = @transform_0, window_bounds = array<i64: 1, 1>}, {transform_indices = @transform_1, window_bounds = array<i64: 8, 256>}, {pipeline_mode = #tpu.pipeline_mode<synchronous>, transform_indices = @transform_2, window_bounds = array<i64: 128, 256>}, {pipeline_mode = #tpu.pipeline_mode<synchronous>, transform_indices = @transform_3, window_bounds = array<i64: 1, 128>}, {transform_indices = @transform_4, window_bounds = array<i64: 8, 128>}]} {
    %c0 = arith.constant 0 : index
    %c0_0 = arith.constant 0 : index
    %0 = vector.load %arg2[%c0, %c0_0] : memref<8x256xf32, #tpu.memory_space<vmem>>, vector<8x256xf32>
    %c0_1 = arith.constant 0 : index
    %c0_2 = arith.constant 0 : index
    %1 = vector.load %arg3[%c0_1, %c0_2] : memref<128x256xf32, #tpu.memory_space<vmem>>, vector<128x256xf32>
    %cst = arith.constant dense<0.000000e+00> : vector<8x128xf32>
    %2 = tpu.matmul %0, %1, %cst {dimension_numbers = #tpu.dot_dimension_numbers<[1], [1], [0], [0], [0, 0, 1, 0], [], []>} : vector<8x256xf32>, vector<128x256xf32>, vector<8x128xf32> -> vector<8x128xf32>
    %c0_3 = arith.constant 0 : index
    %c0_4 = arith.constant 0 : index
    %3 = memref.load %arg1[%c0_3, %c0_4] : memref<1x1xf32, #tpu.memory_space<smem>>
    %4 = vector.broadcast %3 : f32 to vector<8x128xf32>
    %5 = arith.mulf %2, %4 : vector<8x128xf32>
    %c0_5 = arith.constant 0 : index
    %c0_6 = arith.constant 0 : index
    %6 = vector.load %arg4[%c0_5, %c0_6] : memref<1x128xf32, #tpu.memory_space<vmem>>, vector<1x128xf32>
    %7 = vector.broadcast %6 : vector<1x128xf32> to vector<8x128xf32>
    %8 = arith.addf %5, %7 : vector<8x128xf32>
    %9 = arith.mulf %8, %8 : vector<8x128xf32>
    %cst_7 = arith.constant dense<0.000000e+00> : vector<8xf32>
    %10 = vector.multi_reduction <add>, %9, %cst_7 [1] : vector<8x128xf32> to vector<8xf32>
    %11 = vector.shape_cast %10 : vector<8xf32> to vector<8x1xf32>
    %12 = math.sqrt %11 : vector<8x1xf32>
    %cst_8 = arith.constant 9.99999993E-9 : f32
    %13 = vector.broadcast %cst_8 : f32 to vector<8x1xf32>
    %14 = arith.addf %12, %13 : vector<8x1xf32>
    %15 = tpu.reciprocal %14 {approx = true} : vector<8x1xf32> -> vector<8x1xf32>
    %16 = vector.broadcast %15 : vector<8x1xf32> to vector<8x128xf32>
    %17 = arith.mulf %8, %16 : vector<8x128xf32>
    %c0_9 = arith.constant 0 : index
    %c0_10 = arith.constant 0 : index
    %18 = vector.load %arg5[%c0_9, %c0_10] : memref<8x128xf32, #tpu.memory_space<vmem>>, vector<8x128xf32>
    tpu.vector_store %arg5[%c0_9, %c0_10], %17 {strides = array<i32>} : memref<8x128xf32, #tpu.memory_space<vmem>>, vector<8x128xf32>,
    return
  }
  func.func @transform_0(%arg0: i32) -> (i32, i32) {
    %c0_i32 = arith.constant 0 : i32
    %c0_i32_0 = arith.constant 0 : i32
    %c0_i32_1 = arith.constant 0 : i32
    return %c0_i32, %c0_i32_0 : i32, i32
  }
  func.func @transform_1(%arg0: i32) -> (i32, i32) {
    %c0_i32 = arith.constant 0 : i32
    %c0_i32_0 = arith.constant 0 : i32
    return %arg0, %c0_i32 : i32, i32
  }
  func.func @transform_2(%arg0: i32) -> (i32, i32) {
    %c0_i32 = arith.constant 0 : i32
    %c0_i32_0 = arith.constant 0 : i32
    %c0_i32_1 = arith.constant 0 : i32
    return %c0_i32, %c0_i32_0 : i32, i32
  }
  func.func @transform_3(%arg0: i32) -> (i32, i32) {
    %c0_i32 = arith.constant 0 : i32
    %c0_i32_0 = arith.constant 0 : i32
    %c0_i32_1 = arith.constant 0 : i32
    return %c0_i32, %c0_i32_0 : i32, i32
  }
  func.func @transform_4(%arg0: i32) -> (i32, i32) {
    %c0_i32 = arith.constant 0 : i32
    %c0_i32_0 = arith.constant 0 : i32
    return %arg0, %c0_i32 : i32, i32
  }
}

</mosaic_0001>

<llo_original>
// kernel: tpu_custom_call.1
$region0: #{tpu_custom_call.1}
  #allocation0 [shape = 'u32[]', space=smem, size = 0x4, offset = 0x4, fixed_abs, tag = 'smem constant byte address 0x4 - core index']
  #allocation1 [shape = 'u32[72,128]{1,0:T(1,128)}', space=vmem, size = 0x9000, scoped, tag = 'internal scratch']
  #allocation2 [shape = 'f32[1,1]{1,0:T(1,128)S(6)}', space=smem, size = 0x200, scoped, tag = 'scoped memory for tpu_custom_call.1']
  %s0 = inlined_call_operand.<no memory space> [shape: f32[1,1], index: 0, kind: input, shape index: {}]
  %s1 = inlined_call_operand.hbm [shape: f32[16,256], index: 1, kind: input, shape index: {}]
  %s2 = inlined_call_operand.hbm [shape: f32[128,256], index: 2, kind: input, shape index: {}]
  %s3 = inlined_call_operand.vmem [shape: f32[1,128], index: 3, kind: input, shape index: {}]
  %s4 = inlined_call_operand.hbm [shape: f32[16,128], index: 4, kind: output, shape index: {}]
  %s5 = sld [smem:[#allocation0]]
  $region57: #{tpu_custom_call.1} parent=0
    _
  %s7 = ssub.s32 1, %s5
  %s8 = scalar_select 0, %s7, %s5
  %9 = sst [smem:[#allocation2]] %s0
  $region1: #{tpu_custom_call.1} parent=0
    #allocation3 [shape = 'u8[16384]{0}', space=vmem, size = 0x4000, scoped, tag = 'input window, operand 1']
    #allocation4 [shape = 's32[2]{0}', space=sflag, size = 0x8, scoped, tag = 'scoped memory for tpu_custom_call.1']
    #allocation5 [shape = 's32[2]{0}', space=sflag, size = 0x8, scoped, tag = 'scoped memory for tpu_custom_call.1']
    #allocation6 [shape = 'u8[131072]{0}', space=vmem, size = 0x20000, scoped, tag = 'input window, operand 2, single buffered']
    #allocation7 [shape = 's32[1]{0}', space=sflag, size = 0x4, scoped, tag = 'scoped memory for tpu_custom_call.1']
    #allocation8 [shape = 'u8[8192]{0}', space=vmem, size = 0x2000, scoped, tag = 'output window, operand 0']
    %10 = vsyncpa [#allocation4], 0
    %s11 = scalar_lea.sflag [#allocation4], 1
    %12 = vsyncpa %s11, 0
    %13 = vsyncpa [#allocation7], 0
    %14 = vsyncpa [#allocation5], 0
    %s15 = scalar_lea.sflag [#allocation5], 1
    %16 = vsyncpa %s15, 0
    loop: start=0, step=1, limit=4
    $region2: #{tpu_custom_call.1} parent=1 // loop_pre_header
      _
    $region3: #{tpu_custom_call.1} parent=1 // loop_header
      %s18 = sphi 0, %s22
      %p19 = scmp.ge.s32.totalorder %s18, 4
      %s26 = sphi 0, %s26
      %s28 = sphi 0, %s26
      %s29 = sphi 0, %s28
      %s43 = sphi 0, %s29
      %s49 = sphi 0, %s51
      %s52 = sphi 0, %s49
      %s53 = sphi 0, %s52
      %s69 = sphi 0, %s53
      %s73 = sphi 0, %s73
      %s75 = sphi 0, %s73
      %s76 = sphi 0, %s75
      %s90 = sphi 0, %s76
      %s94 = sphi 0, %s94
      %s96 = sphi 0, %s94
      %s97 = sphi 0, %s96
      %s111 = sphi 0, %s97
      %s117 = sphi 0, %s119
      %s120 = sphi 0, %s117
      %s121 = sphi 0, %s120
      %s137 = sphi 0, %s121
    $region4: #{tpu_custom_call.1} parent=1 // loop_header_branch
      %21 = sbr.rel (%p19) target = $region8
    $region5: #{tpu_custom_call.1} parent=1 // loop_body
      %s23 = ssub.s32 %s18, 1
      %s24 = ssub.s32 %s18, 2
      %s25 = sadd.s32 %s18, 1
      %s27 = sadd.s32 %s26, 1
      %p30 = scmp.eq.s32.totalorder %s18, 1
      %p31 = scmp.ne.s32.totalorder %s26, %s28
      %p32 = scmp.eq.s32.totalorder %s18, 0
      %p33 = por %p31, %p32
      %p34 = scmp.ne.s32.totalorder %s26, %s28
      %p35 = scmp.eq.s32.totalorder %s23, 1
      %p36 = por %p34, %p35
      %p37 = scmp.ne.s32.totalorder %s28, %s29
      %p38 = scmp.eq.s32.totalorder %s23, 0
      %p39 = por %p37, %p38
      %p40 = scmp.ne.s32.totalorder %s28, %s29
      %p41 = scmp.eq.s32.totalorder %s24, 1
      %p42 = por %p40, %p41
      %p44 = scmp.ne.s32.totalorder %s29, %s43
      %p45 = scmp.eq.s32.totalorder %s24, 0
      %p46 = por %p44, %p45
      %s47 = ssub.s32 %s18, %s25
      %p48 = scmp.eq.s32.totalorder %s47, 0
      %s50 = sadd.s32 %s49, 1
      %s51 = scalar_select %p48, %s49, %s50
      %p54 = pneg %p48
      %p55 = scmp.eq.s32.totalorder %s18, 1
      %p56 = por %p54, %p55
      %p57 = scmp.ne.s32.totalorder %s49, %s52
      %p58 = scmp.eq.s32.totalorder %s18, 0
      %p59 = por %p57, %p58
      %p60 = scmp.ne.s32.totalorder %s49, %s52
      %p61 = scmp.eq.s32.totalorder %s23, 1
      %p62 = por %p60, %p61
      %p63 = scmp.ne.s32.totalorder %s52, %s53
      %p64 = scmp.eq.s32.totalorder %s23, 0
      %p65 = por %p63, %p64
      %p66 = scmp.ne.s32.totalorder %s52, %s53
      %p67 = scmp.eq.s32.totalorder %s24, 1
      %p68 = por %p66, %p67
      %p70 = scmp.ne.s32.totalorder %s53, %s69
      %p71 = scmp.eq.s32.totalorder %s24, 0
      %p72 = por %p70, %p71
      %s74 = sadd.s32 %s73, 1
      %p77 = scmp.eq.s32.totalorder %s18, 1
      %p78 = scmp.ne.s32.totalorder %s73, %s75
      %p79 = scmp.eq.s32.totalorder %s18, 0
      %p80 = por %p78, %p79
      %p81 = scmp.ne.s32.totalorder %s73, %s75
      %p82 = scmp.eq.s32.totalorder %s23, 1
      %p83 = por %p81, %p82
      %p84 = scmp.ne.s32.totalorder %s75, %s76
      %p85 = scmp.eq.s32.totalorder %s23, 0
      %p86 = por %p84, %p85
      %p87 = scmp.ne.s32.totalorder %s75, %s76
      %p88 = scmp.eq.s32.totalorder %s24, 1
      %p89 = por %p87, %p88
      %p91 = scmp.ne.s32.totalorder %s76, %s90
      %p92 = scmp.eq.s32.totalorder %s24, 0
      %p93 = por %p91, %p92
      %s95 = sadd.s32 %s94, 1
      %p98 = scmp.eq.s32.totalorder %s18, 1
      %p99 = scmp.ne.s32.totalorder %s94, %s96
      %p100 = scmp.eq.s32.totalorder %s18, 0
      %p101 = por %p99, %p100
      %p102 = scmp.ne.s32.totalorder %s94, %s96
      %p103 = scmp.eq.s32.totalorder %s23, 1
      %p104 = por %p102, %p103
      %p105 = scmp.ne.s32.totalorder %s96, %s97
      %p106 = scmp.eq.s32.totalorder %s23, 0
      %p107 = por %p105, %p106
      %p108 = scmp.ne.s32.totalorder %s96, %s97
      %p109 = scmp.eq.s32.totalorder %s24, 1
      %p110 = por %p108, %p109
      %p112 = scmp.ne.s32.totalorder %s97, %s111
      %p113 = scmp.eq.s32.totalorder %s24, 0
      %p114 = por %p112, %p113
      %s115 = ssub.s32 %s18, %s25
      %p116 = scmp.eq.s32.totalorder %s115, 0
      %s118 = sadd.s32 %s117, 1
      %s119 = scalar_select %p116, %s117, %s118
      %p122 = pneg %p116
      %p123 = scmp.eq.s32.totalorder %s18, 1
      %p124 = por %p122, %p123
      %p125 = scmp.ne.s32.totalorder %s117, %s120
      %p126 = scmp.eq.s32.totalorder %s18, 0
      %p127 = por %p125, %p126
      %p128 = scmp.ne.s32.totalorder %s117, %s120
      %p129 = scmp.eq.s32.totalorder %s23, 1
      %p130 = por %p128, %p129
      %p131 = scmp.ne.s32.totalorder %s120, %s121
      %p132 = scmp.eq.s32.totalorder %s23, 0
      %p133 = por %p131, %p132
      %p134 = scmp.ne.s32.totalorder %s120, %s121
      %p135 = scmp.eq.s32.totalorder %s24, 1
      %p136 = por %p134, %p135
      %p138 = scmp.ne.s32.totalorder %s121, %s137
      %p139 = scmp.eq.s32.totalorder %s24, 0
      %p140 = por %p138, %p139
      %p141 = scmp.le.s32.totalorder 1, %s18
      %p142 = scmp.lt.s32.totalorder %s18, 3
      %p143 = pnand %p141, %p142
      %p144 = pneg %p143
      // Predicated region
      $region9: #{tpu_custom_call.1} parent=5 // pred_check
        _
      $region10: #{tpu_custom_call.1} parent=5 // pred_check_branch
        %146 = sbr.rel (%p143) target = $region12
      $region11: #{tpu_custom_call.1} parent=5 // pred_region
        %s147 = ssub.s32 %s18, 1
        // Predicated region
        $region13: #{tpu_custom_call.1} parent=11 // pred_check
          %p148 = pneg %p39
        $region14: #{tpu_custom_call.1} parent=11 // pred_check_branch
          %150 = sbr.rel (%p148) target = $region16
        $region15: #{tpu_custom_call.1} parent=11 // pred_region
          _
        $region16: #{tpu_custom_call.1} parent=11 // pred_fallthru
          _
        // Predicated region
        $region17: #{tpu_custom_call.1} parent=11 // pred_check
          %p151 = pneg %p86
        $region18: #{tpu_custom_call.1} parent=11 // pred_check_branch
          %153 = sbr.rel (%p151) target = $region20
        $region19: #{tpu_custom_call.1} parent=11 // pred_region
          %155 = vsyncadd [#allocation7], 0
          %s156 = sshll.u32 %s2, 4
          %s157 = int_to_ptr.hbm [resolvable:$true] %s156
          %s158 = sshll.u32 [#allocation6], 4
          %s159 = int_to_ptr.vmem [resolvable:$true] %s158
          %164 = dma.hbm_to_vmem [thread:$0]  %s157, 4096, %s159, [#allocation7], 256, 256, 16
        $region20: #{tpu_custom_call.1} parent=11 // pred_fallthru
          _
        // Predicated region
        $region21: #{tpu_custom_call.1} parent=11 // pred_check
          %p165 = pneg %p107
        $region22: #{tpu_custom_call.1} parent=11 // pred_check_branch
          %167 = sbr.rel (%p165) target = $region24
        $region23: #{tpu_custom_call.1} parent=11 // pred_region
          _
        $region24: #{tpu_custom_call.1} parent=11 // pred_fallthru
          _
      $region12: #{tpu_custom_call.1} parent=5 // pred_fallthru
        _
      %p168 = scmp.lt.s32.totalorder %s18, 2
      // Predicated region
      $region25: #{tpu_custom_call.1} parent=5 // pred_check
        %p169 = pneg %p168
      $region26: #{tpu_custom_call.1} parent=5 // pred_check_branch
        %171 = sbr.rel (%p169) target = $region28
      $region27: #{tpu_custom_call.1} parent=5 // pred_region
        // Predicated region
        $region29: #{tpu_custom_call.1} parent=27 // pred_check
          %p172 = pneg %p59
        $region30: #{tpu_custom_call.1} parent=27 // pred_check_branch
          %174 = sbr.rel (%p172) target = $region32
        $region31: #{tpu_custom_call.1} parent=27 // pred_region
          %s175 = sand.u32 %s49, 1
          %s176 = scalar_lea.sflag [#allocation4], %s175
          %s177 = sand.u32 %s49, 1
          %s178 = smul.addr %s177, 16
          %s179 = scalar_lea.vmem [#allocation3], %s178
          %181 = vsyncadd %s176, 0
          %s182 = smul.addr %s18, 2
          %s183 = smul.addr %s182, 8
          %s184 = scalar_lea.hbm %s1, %s183
          %s186 = sshll.u32 %s184, 4
          %s187 = int_to_ptr.hbm [resolvable:$true] %s186
          %s188 = sshll.u32 %s179, 4
          %s189 = int_to_ptr.vmem [resolvable:$true] %s188
          %191 = dma.hbm_to_vmem [thread:$0]  %s187, 256, %s189, %s176
        $region32: #{tpu_custom_call.1} parent=27 // pred_fallthru
          _
      $region28: #{tpu_custom_call.1} parent=5 // pred_fallthru
        _
      %p192 = scmp.le.s32.totalorder 1, %s18
      %p193 = scmp.lt.s32.totalorder %s18, 3
      %p194 = pnand %p192, %p193
      %p195 = pneg %p194
      // Predicated region
      $region33: #{tpu_custom_call.1} parent=5 // pred_check
        _
      $region34: #{tpu_custom_call.1} parent=5 // pred_check_branch
        %197 = sbr.rel (%p194) target = $region36
      $region35: #{tpu_custom_call.1} parent=5 // pred_region
        %s198 = ssub.s32 %s18, 1
        %s199 = sand.u32 %s52, 1
        %s200 = scalar_lea.sflag [#allocation4], %s199
        %s201 = sand.u32 %s52, 1
        %s202 = smul.addr %s201, 16
        %s203 = scalar_lea.vmem [#allocation3], %s202
        // Predicated region
        $region37: #{tpu_custom_call.1} parent=35 // pred_check
          %p204 = pneg %p65
        $region38: #{tpu_custom_call.1} parent=35 // pred_check_branch
          %206 = sbr.rel (%p204) target = $region40
        $region39: #{tpu_custom_call.1} parent=35 // pred_region
          %208 = dma.done %s200, 256
        $region40: #{tpu_custom_call.1} parent=35 // pred_fallthru
          _
        // Predicated region
        $region41: #{tpu_custom_call.1} parent=35 // pred_check
          %p209 = pneg %p86
        $region42: #{tpu_custom_call.1} parent=35 // pred_check_branch
          %211 = sbr.rel (%p209) target = $region44
        $region43: #{tpu_custom_call.1} parent=35 // pred_region
          %213 = dma.done [#allocation7], 4096
        $region44: #{tpu_custom_call.1} parent=35 // pred_fallthru
          _
        %p214 = pneg %p39
        %p215 = pneg %p36
        %s216 = sand.u32 %s52, 1
        %s217 = scalar_lea.sflag [#allocation4], %s216
        %s218 = sand.u32 %s52, 1
        %s219 = smul.addr %s218, 16
        %s220 = scalar_lea.vmem [#allocation3], %s219
        %p221 = pneg %p65
        %p222 = pneg %p62
        %p223 = pneg %p86
        %p224 = pneg %p83
        %p225 = pneg %p107
        %p226 = pneg %p104
        %p227 = pneg %p133
        %p228 = pneg %p130
        %s229 = sand.u32 %s120, 1
        %s230 = scalar_lea.sflag [#allocation5], %s229
        %s231 = sand.u32 %s120, 1
        %s232 = smul.addr %s231, 8
        %s233 = scalar_lea.vmem [#allocation8], %s232
        %v234 = vld [vmem:[%s203] sm:$0xff]
        %v235 = vld [vmem:[%s203 + $0x8] sm:$0xff]
        %v236 = vld [vmem:[#allocation6] sm:$0xff]
        %v237 = vld [vmem:[#allocation6 + $0x8] sm:$0xff]
        %v238 = vld [vmem:[#allocation6 + $0x10] sm:$0xff]
        %v239 = vld [vmem:[#allocation6 + $0x18] sm:$0xff]
        %v240 = vld [vmem:[#allocation6 + $0x20] sm:$0xff]
        %v241 = vld [vmem:[#allocation6 + $0x28] sm:$0xff]
        %v242 = vld [vmem:[#allocation6 + $0x30] sm:$0xff]
        %v243 = vld [vmem:[#allocation6 + $0x38] sm:$0xff]
        %v244 = vld [vmem:[#allocation6 + $0x40] sm:$0xff]
        %v245 = vld [vmem:[#allocation6 + $0x48] sm:$0xff]
        %v246 = vld [vmem:[#allocation6 + $0x50] sm:$0xff]
        %v247 = vld [vmem:[#allocation6 + $0x58] sm:$0xff]
        %v248 = vld [vmem:[#allocation6 + $0x60] sm:$0xff]
        %v249 = vld [vmem:[#allocation6 + $0x68] sm:$0xff]
        %v250 = vld [vmem:[#allocation6 + $0x70] sm:$0xff]
        %v251 = vld [vmem:[#allocation6 + $0x78] sm:$0xff]
        %v252 = vld [vmem:[#allocation6 + $0x80] sm:$0xff]
        %v253 = vld [vmem:[#allocation6 + $0x88] sm:$0xff]
        %v254 = vld [vmem:[#allocation6 + $0x90] sm:$0xff]
        %v255 = vld [vmem:[#allocation6 + $0x98] sm:$0xff]
        %v256 = vld [vmem:[#allocation6 + $0xa0] sm:$0xff]
        %v257 = vld [vmem:[#allocation6 + $0xa8] sm:$0xff]
        %v258 = vld [vmem:[#allocation6 + $0xb0] sm:$0xff]
        %v259 = vld [vmem:[#allocation6 + $0xb8] sm:$0xff]
        %v260 = vld [vmem:[#allocation6 + $0xc0] sm:$0xff]
        %v261 = vld [vmem:[#allocation6 + $0xc8] sm:$0xff]
        %v262 = vld [vmem:[#allocation6 + $0xd0] sm:$0xff]
        %v263 = vld [vmem:[#allocation6 + $0xd8] sm:$0xff]
        %v264 = vld [vmem:[#allocation6 + $0xe0] sm:$0xff]
        %v265 = vld [vmem:[#allocation6 + $0xe8] sm:$0xff]
        %v266 = vld [vmem:[#allocation6 + $0xf0] sm:$0xff]
        %v267 = vld [vmem:[#allocation6 + $0xf8] sm:$0xff]
        %268 = vmatpush.xpose.msra.mxu0 %v266
        %269 = vmatpush.xpose.msra.mxu0 %v264
        %270 = vmatpush.xpose.msra.mxu0 %v262
        %271 = vmatpush.xpose.msra.mxu0 %v260
        %272 = vmatpush.xpose.msra.mxu0 %v258
        %273 = vmatpush.xpose.msra.mxu0 %v256
        %274 = vmatpush.xpose.msra.mxu0 %v254
        %275 = vmatpush.xpose.msra.mxu0 %v252
        %276 = vmatpush.xpose.msra.mxu0 %v250
        %277 = vmatpush.xpose.msra.mxu0 %v248
        %278 = vmatpush.xpose.msra.mxu0 %v246
        %279 = vmatpush.xpose.msra.mxu0 %v244
        %280 = vmatpush.xpose.msra.mxu0 %v242
        %281 = vmatpush.xpose.msra.mxu0 %v240
        %282 = vmatpush.xpose.msra.mxu0 %v238
        %283 = vmatpush.xpose.msra.mxu0 %v236
        %284 = vmatmul.f32.gmra.mxu0 %v234
        %v285 = vpop.f32.mrf.mxu0
        %v286 = vadd.f32 0.0, %v285
        %287 = vdwg.mxu0
        %288 = vmatpush.xpose.msra.mxu0 %v267
        %289 = vmatpush.xpose.msra.mxu0 %v265
        %290 = vmatpush.xpose.msra.mxu0 %v263
        %291 = vmatpush.xpose.msra.mxu0 %v261
        %292 = vmatpush.xpose.msra.mxu0 %v259
        %293 = vmatpush.xpose.msra.mxu0 %v257
        %294 = vmatpush.xpose.msra.mxu0 %v255
        %295 = vmatpush.xpose.msra.mxu0 %v253
        %296 = vmatpush.xpose.msra.mxu0 %v251
        %297 = vmatpush.xpose.msra.mxu0 %v249
        %298 = vmatpush.xpose.msra.mxu0 %v247
        %299 = vmatpush.xpose.msra.mxu0 %v245
        %300 = vmatpush.xpose.msra.mxu0 %v243
        %301 = vmatpush.xpose.msra.mxu0 %v241
        %302 = vmatpush.xpose.msra.mxu0 %v239
        %303 = vmatpush.xpose.msra.mxu0 %v237
        %304 = vmatmul.f32.gmra.mxu0 %v235
        %v305 = vpop.f32.mrf.mxu0
        %v306 = vadd.f32 %v286, %v305
        %307 = vdwg.mxu0
        %s308 = sld [smem:[#allocation2]]
        %v309 = vstv %s308
        %v310 = vmul.f32 %v306, %v309
        %v311 = vld [vmem:[%s3] sm:$0x1]
        %v313 = vperm.slane %v311, 0
        %v315 = vadd.f32 %v310, %v313
        %v316 = vmul.f32 %v315, %v315
        %317 = vadd.xlane.f32.xlu0 %v316
        %v318 = vpop.xlane.xlu0 %317
        %v319 = vrsqrt.pop %v318
        %v320 = vmul.f32 %v319, %v318
        %v321 = vmul.f32 %v320, %v319
        %v322 = vmul.f32 0.5, %v321
        %v323 = vsub.f32 1.5, %v322
        %v324 = vmul.f32 %v319, %v323
        %v325 = vmul.f32 %v318, %v324
        %vm326 = vcmp.eq.f32.partialorder %v318, inf
        %v327 = vsel %vm326, %v318, %v325
        %vm328 = vcmp.eq.f32.partialorder %v318, 0.0
        %v329 = vand.u32 %v318, 2147483648
        %v330 = vsel %vm328, %v329, %v327
        %v331 = vadd.f32 %v330, 1e-08
        %v332 = vrcp.pop %v331
        %v333 = vmul.f32 %v315, %v332
        %334 = vst [vmem:[%s233] sm:$0xff] %v333
        %s335 = sand.u32 %s120, 1
        %s336 = scalar_lea.sflag [#allocation5], %s335
        %s337 = sand.u32 %s120, 1
        %s338 = smul.addr %s337, 8
        %s339 = scalar_lea.vmem [#allocation8], %s338
        // Predicated region
        $region45: #{tpu_custom_call.1} parent=35 // pred_check
          %p340 = pneg %p130
        $region46: #{tpu_custom_call.1} parent=35 // pred_check_branch
          %342 = sbr.rel (%p340) target = $region48
        $region47: #{tpu_custom_call.1} parent=35 // pred_region
          %344 = vsyncadd %s336, 0
          %s345 = smul.addr %s23, 8
          %s346 = scalar_lea.hbm %s4, %s345
          %s348 = sshll.u32 %s339, 4
          %s349 = int_to_ptr.vmem [resolvable:$true] %s348
          %s350 = sshll.u32 %s346, 4
          %s351 = int_to_ptr.hbm [resolvable:$true] %s350
          %353 = dma.vmem_to_hbm [thread:$0]  %s349, 128, %s351, %s336
        $region48: #{tpu_custom_call.1} parent=35 // pred_fallthru
          _
      $region36: #{tpu_custom_call.1} parent=5 // pred_fallthru
        _
      %p354 = scmp.le.s32.totalorder 2, %s18
      // Predicated region
      $region49: #{tpu_custom_call.1} parent=5 // pred_check
        %p355 = pneg %p354
      $region50: #{tpu_custom_call.1} parent=5 // pred_check_branch
        %357 = sbr.rel (%p355) target = $region52
      $region51: #{tpu_custom_call.1} parent=5 // pred_region
        %s358 = ssub.s32 %s18, 2
        // Predicated region
        $region53: #{tpu_custom_call.1} parent=51 // pred_check
          %p359 = pneg %p136
        $region54: #{tpu_custom_call.1} parent=51 // pred_check_branch
          %361 = sbr.rel (%p359) target = $region56
        $region55: #{tpu_custom_call.1} parent=51 // pred_region
          %s362 = sand.u32 %s121, 1
          %s363 = scalar_lea.sflag [#allocation5], %s362
          %s364 = sand.u32 %s121, 1
          %s365 = smul.addr %s364, 8
          %s366 = scalar_lea.vmem [#allocation8], %s365
          %368 = dma.done %s363, 128
        $region56: #{tpu_custom_call.1} parent=51 // pred_fallthru
          _
      $region52: #{tpu_custom_call.1} parent=5 // pred_fallthru
        _
    $region6: #{tpu_custom_call.1} parent=1 // loop_footer
      %s22 = sadd.s32 1, %s18
    $region7: #{tpu_custom_call.1} parent=1 // loop_footer_branch
      %17 = sbr.rel target = $region3
    $region8: #{tpu_custom_call.1} parent=1 // loop_exit
      _
    %369 = vsyncpa [#allocation4], 1
    %s370 = scalar_lea.sflag [#allocation4], 1
    %371 = vsyncpa %s370, 1
    %372 = vsyncpa [#allocation7], 1
    %373 = vsyncpa [#allocation5], 1
    %s374 = scalar_lea.sflag [#allocation5], 1
    %375 = vsyncpa %s374, 1

</llo_original>
